<compile_context>
chip_gen: v5e
topology: v5e:2x2
jax: 0.10.0
libtpu: 0.0.40
codegen_flags: <defaults>
</compile_context>

<pallas_src>
import jax
import jax.numpy as jnp
from jax.experimental import pallas as pl
from jax.experimental.pallas import tpu as pltpu

LANE = 128
_SUBLANE = {1: 32, 2: 16, 4: 8}  # dtype itemsize -> sublane multiple


def _residual_ordinary_kernel(x_ref, y_ref, o_ref):
    o_ref[...] = x_ref[...] + y_ref[...]


def _residual_normequiv_kernel(alpha_ref, x_ref, y_ref, o_ref):
    a = alpha_ref[0]                                  # f32 scalar from SMEM
    x = x_ref[...].astype(jnp.float32)
    y = y_ref[...].astype(jnp.float32)
    o_ref[...] = (a * x + (1.0 - a) * y).astype(o_ref.dtype)


def _plain_forward(x, y, mode, alpha):
    """XLA fused path (tiny or ragged inputs)."""
    if mode == "norm-equiv":
        a = jnp.asarray(alpha, dtype=jnp.float32).reshape(())
        xf = x.astype(jnp.float32)
        yf = y.astype(jnp.float32)
        return (a * xf + (1.0 - a) * yf).astype(x.dtype)
    return x + y


def residual_connection(x, y, mode="ordinary", alpha=None, *,
                        max_block_bytes=4 << 20,   # ~4 MiB/buffer: v7x-safe, near HBM roofline
                        min_pallas_bytes=1 << 20,  # below this, plain jnp is faster
                        force_pallas=False,
                        donate_x=False):
    """JAX/Pallas equivalent of ResidualConnection.forward."""
    assert x.shape == y.shape and x.dtype == y.dtype
    if mode == "norm-equiv" and alpha is None:
        alpha = jnp.array([0.5], dtype=jnp.float32)   # parameter init from __init__

    orig_shape = x.shape
    n = x.size
    itemsize = jnp.dtype(x.dtype).itemsize

    # Tiny inputs: kernel-launch overhead dwarfs the data movement.
    if not force_pallas and n * itemsize < min_pallas_bytes:
        return _plain_forward(x, y, mode, alpha)

    # Ragged sizes: padding both inputs + slicing the output is ~3x the kernel's
    # own 2R+1W HBM traffic, so XLA's fused add is strictly better here.
    if n % LANE != 0:
        return _plain_forward(x, y, mode, alpha)

    # Lane-dense (rows, 128) slab: free reshape, no pad, no final slice.
    rows = n // LANE
    xf = x.reshape(rows, LANE)
    yf = y.reshape(rows, LANE)

    # Row tile: ~max_block_bytes per buffer, rounded to the dtype's sublane
    # multiple.  Arrays that fit in one tile are still split into ~4 grid steps
    # so the pipeline overlaps DMA/compute and v7x can use both TensorCores.
    sub = _SUBLANE.get(itemsize, 8)
    target = max(sub, (max_block_bytes // (LANE * itemsize)) // sub * sub)
    if rows > target:
        tr = target
    else:
        desired_steps = 4
        tr = -(-(-(-rows // desired_steps)) // sub) * sub   # cdiv(rows,4) rounded up to sublane
        tr = max(sub, min(tr, rows if rows % sub == 0 else tr))
    grid = (pl.cdiv(rows, tr),)          # ragged grid; partial tail block is masked

    tile_bytes = tr * LANE * itemsize
    vmem_limit = int(min(64 << 20, max(32 << 20, 8 * tile_bytes)))

    data_spec = pl.BlockSpec((tr, LANE), lambda i: (i, 0))
    cparams = pltpu.CompilerParams(
        dimension_semantics=("parallel",),
        vmem_limit_bytes=vmem_limit,
    )
    out_shape = jax.ShapeDtypeStruct((rows, LANE), x.dtype)
    bytes_accessed = 3 * n * itemsize

    if mode == "norm-equiv":
        alpha_arr = jnp.asarray(alpha, dtype=jnp.float32).reshape(1)
        out = pl.pallas_call(
            _residual_normequiv_kernel,
            out_shape=out_shape,
            grid_spec=pltpu.PrefetchScalarGridSpec(
                num_scalar_prefetch=0,
                grid=grid,
                in_specs=[
                    pl.BlockSpec(memory_space=pltpu.SMEM),  # alpha scalar
                    data_spec,
                    data_spec,
                ],
                out_specs=data_spec,
            ),
            compiler_params=cparams,
            cost_estimate=pl.CostEstimate(
                flops=3 * n, transcendentals=0, bytes_accessed=bytes_accessed),
            input_output_aliases=({1: 0} if donate_x else {}),
        )(alpha_arr, xf, yf)
    else:
        out = pl.pallas_call(
            _residual_ordinary_kernel,
            out_shape=out_shape,
            grid_spec=pltpu.PrefetchScalarGridSpec(
                num_scalar_prefetch=0,
                grid=grid,
                in_specs=[data_spec, data_spec],
                out_specs=data_spec,
            ),
            compiler_params=cparams,
            cost_estimate=pl.CostEstimate(
                flops=n, transcendentals=0, bytes_accessed=bytes_accessed),
            input_output_aliases=({0: 0} if donate_x else {}),
        )(xf, yf)

    return out.reshape(orig_shape)


if __name__ == "__main__":
    key = jax.random.PRNGKey(0)
    kx, ky = jax.random.split(key)

    # NCHW activations.  2048 elems -> lane-aligned fast path, 16 rows split
    # into a 2-step grid; force_pallas so the tiny-input bypass doesn't skip it.
    x = jax.random.normal(kx, (2, 4, 16, 16), dtype=jnp.float32)
    y = jax.random.normal(ky, (2, 4, 16, 16), dtype=jnp.float32)

    # mode='ordinary'
    out_ord = residual_connection(x, y, mode="ordinary", force_pallas=True)
    jax.block_until_ready(out_ord)
    assert out_ord.shape == x.shape
    assert jnp.allclose(out_ord, x + y, atol=1e-6)

    # mode='ordinary' with in-place alias hint (output reuses x's buffer)
    out_alias = residual_connection(x, y, mode="ordinary", force_pallas=True,
                                    donate_x=True)
    jax.block_until_ready(out_alias)
    assert jnp.allclose(out_alias, x + y, atol=1e-6)

    # mode='norm-equiv' with default parameter init (alpha = 0.5)
    out_ne = residual_connection(x, y, mode="norm-equiv", force_pallas=True)
    jax.block_until_ready(out_ne)
    assert jnp.allclose(out_ne, 0.5 * x + 0.5 * y, atol=1e-6)

    # Medium case exercising the multi-block grid with a partial tail block
    # (19200 elems -> 150 rows, tile = 64 rows -> grid of 3).
    kx2, ky2 = jax.random.split(ky)
    x2 = jax.random.normal(kx2, (2, 6, 40, 40), dtype=jnp.float32)
    y2 = jax.random.normal(ky2, (2, 6, 40, 40), dtype=jnp.float32)
    alpha = jnp.array([0.5], dtype=jnp.float32)
    out2 = residual_connection(x2, y2, mode="norm-equiv", alpha=alpha,
                               force_pallas=True, max_block_bytes=32 * 1024)
    jax.block_until_ready(out2)
    assert jnp.allclose(out2, 0.5 * x2 + 0.5 * y2, atol=1e-6)

    # bf16 activations: alpha stays f32 in SMEM, blend in f32, cast on store.
    x4 = x.astype(jnp.bfloat16)
    y4 = y.astype(jnp.bfloat16)
    out4 = residual_connection(x4, y4, mode="norm-equiv", alpha=alpha,
                               force_pallas=True)
    jax.block_until_ready(out4)
    ref4 = (0.5 * x4.astype(jnp.float32) + 0.5 * y4.astype(jnp.float32)
            ).astype(jnp.bfloat16)
    assert jnp.allclose(out4.astype(jnp.float32), ref4.astype(jnp.float32),
                        atol=1e-2)

    # Ragged size (1155 elems, not a multiple of 128) -> XLA fused fallback
    # (padding the Pallas path would triple HBM traffic).
    kx3, ky3 = jax.random.split(kx2)
    x3 = jax.random.normal(kx3, (3, 5, 7, 11), dtype=jnp.float32)
    y3 = jax.random.normal(ky3, (3, 5, 7, 11), dtype=jnp.float32)
    out3 = residual_connection(x3, y3, mode="ordinary", force_pallas=True)
    jax.block_until_ready(out3)
    assert jnp.allclose(out3, x3 + y3, atol=1e-6)

    print("KERNEL_OK")
</pallas_src>

<mosaic_0001>
module attributes {stable_mosaic.version = 11 : i64} {
  func.func @_residual_ordinary_kernel(%arg0: i32, %arg1: memref<8x128xf32, #tpu.memory_space<vmem>>, %arg2: memref<8x128xf32, #tpu.memory_space<vmem>>, %arg3: memref<8x128xf32, #tpu.memory_space<vmem>>) attributes {dimension_semantics = [#tpu.dimension_semantics<parallel>], iteration_bounds = array<i64: 2>, scalar_prefetch = 0 : i64, scratch_operands = 0 : i64, tpu.core_type = #tpu.core_type<tc>, window_params = [{transform_indices = @transform_0, window_bounds = array<i64: 8, 128>}, {transform_indices = @transform_1, window_bounds = array<i64: 8, 128>}, {transform_indices = @transform_2, window_bounds = array<i64: 8, 128>}]} {
    %c0 = arith.constant 0 : index
    %c0_0 = arith.constant 0 : index
    %0 = vector.load %arg1[%c0, %c0_0] : memref<8x128xf32, #tpu.memory_space<vmem>>, vector<8x128xf32>
    %c0_1 = arith.constant 0 : index
    %c0_2 = arith.constant 0 : index
    %1 = vector.load %arg2[%c0_1, %c0_2] : memref<8x128xf32, #tpu.memory_space<vmem>>, vector<8x128xf32>
    %2 = arith.addf %0, %1 : vector<8x128xf32>
    %c0_3 = arith.constant 0 : index
    %c0_4 = arith.constant 0 : index
    %3 = vector.load %arg3[%c0_3, %c0_4] : memref<8x128xf32, #tpu.memory_space<vmem>>, vector<8x128xf32>
    tpu.vector_store %arg3[%c0_3, %c0_4], %2 {strides = array<i32>} : memref<8x128xf32, #tpu.memory_space<vmem>>, vector<8x128xf32>,
    return
  }
  func.func @transform_0(%arg0: i32) -> (i32, i32) {
    %c0_i32 = arith.constant 0 : i32
    %c0_i32_0 = arith.constant 0 : i32
    return %arg0, %c0_i32 : i32, i32
  }
  func.func @transform_1(%arg0: i32) -> (i32, i32) {
    %c0_i32 = arith.constant 0 : i32
    %c0_i32_0 = arith.constant 0 : i32
    return %arg0, %c0_i32 : i32, i32
  }
  func.func @transform_2(%arg0: i32) -> (i32, i32) {
    %c0_i32 = arith.constant 0 : i32
    %c0_i32_0 = arith.constant 0 : i32
    return %arg0, %c0_i32 : i32, i32
  }
}

</mosaic_0001>

<llo_original>
// kernel: tpu_custom_call.1
$region0: #{tpu_custom_call.1}
  #allocation0 [shape = 'u32[]', space=smem, size = 0x4, offset = 0x4, fixed_abs, tag = 'smem constant byte address 0x4 - core index']
  #allocation1 [shape = 'u32[72,128]{1,0:T(1,128)}', space=vmem, size = 0x9000, scoped, tag = 'internal scratch']
  %s0 = inlined_call_operand.hbm [shape: f32[16,128], index: 0, kind: input, shape index: {}]
  %s1 = inlined_call_operand.hbm [shape: f32[16,128], index: 1, kind: input, shape index: {}]
  %s2 = inlined_call_operand.hbm [shape: f32[16,128], index: 2, kind: output, shape index: {}]
  %s3 = sld [smem:[#allocation0]]
  $region49: #{tpu_custom_call.1} parent=0
    _
  %s5 = ssub.s32 1, %s3
  %s6 = scalar_select 0, %s5, %s3
  $region1: #{tpu_custom_call.1} parent=0
    #allocation2 [shape = 'u8[8192]{0}', space=vmem, size = 0x2000, scoped, tag = 'input window, operand 0']
    #allocation3 [shape = 's32[2]{0}', space=sflag, size = 0x8, scoped, tag = 'scoped memory for tpu_custom_call.1']
    #allocation4 [shape = 's32[2]{0}', space=sflag, size = 0x8, scoped, tag = 'scoped memory for tpu_custom_call.1']
    #allocation5 [shape = 'u8[8192]{0}', space=vmem, size = 0x2000, scoped, tag = 'input window, operand 1']
    #allocation6 [shape = 's32[2]{0}', space=sflag, size = 0x8, scoped, tag = 'scoped memory for tpu_custom_call.1']
    #allocation7 [shape = 'u8[8192]{0}', space=vmem, size = 0x2000, scoped, tag = 'output window, operand 0']
    %7 = vsyncpa [#allocation3], 0
    %s8 = scalar_lea.sflag [#allocation3], 1
    %9 = vsyncpa %s8, 0
    %10 = vsyncpa [#allocation6], 0
    %s11 = scalar_lea.sflag [#allocation6], 1
    %12 = vsyncpa %s11, 0
    %13 = vsyncpa [#allocation4], 0
    %s14 = scalar_lea.sflag [#allocation4], 1
    %15 = vsyncpa %s14, 0
    loop: start=0, step=1, limit=4
    $region2: #{tpu_custom_call.1} parent=1 // loop_pre_header
      _
    $region3: #{tpu_custom_call.1} parent=1 // loop_header
      %s17 = sphi 0, %s21
      %p18 = scmp.ge.s32.totalorder %s17, 4
      %s27 = sphi 0, %s29
      %s30 = sphi 0, %s27
      %s31 = sphi 0, %s30
      %s47 = sphi 0, %s31
      %s53 = sphi 0, %s55
      %s56 = sphi 0, %s53
      %s57 = sphi 0, %s56
      %s73 = sphi 0, %s57
      %s79 = sphi 0, %s81
      %s82 = sphi 0, %s79
      %s83 = sphi 0, %s82
      %s99 = sphi 0, %s83
    $region4: #{tpu_custom_call.1} parent=1 // loop_header_branch
      %20 = sbr.rel (%p18) target = $region8
    $region5: #{tpu_custom_call.1} parent=1 // loop_body
      %s22 = ssub.s32 %s17, 1
      %s23 = ssub.s32 %s17, 2
      %s24 = sadd.s32 %s17, 1
      %s25 = ssub.s32 %s17, %s24
      %p26 = scmp.eq.s32.totalorder %s25, 0
      %s28 = sadd.s32 %s27, 1
      %s29 = scalar_select %p26, %s27, %s28
      %p32 = pneg %p26
      %p33 = scmp.eq.s32.totalorder %s17, 1
      %p34 = por %p32, %p33
      %p35 = scmp.ne.s32.totalorder %s27, %s30
      %p36 = scmp.eq.s32.totalorder %s17, 0
      %p37 = por %p35, %p36
      %p38 = scmp.ne.s32.totalorder %s27, %s30
      %p39 = scmp.eq.s32.totalorder %s22, 1
      %p40 = por %p38, %p39
      %p41 = scmp.ne.s32.totalorder %s30, %s31
      %p42 = scmp.eq.s32.totalorder %s22, 0
      %p43 = por %p41, %p42
      %p44 = scmp.ne.s32.totalorder %s30, %s31
      %p45 = scmp.eq.s32.totalorder %s23, 1
      %p46 = por %p44, %p45
      %p48 = scmp.ne.s32.totalorder %s31, %s47
      %p49 = scmp.eq.s32.totalorder %s23, 0
      %p50 = por %p48, %p49
      %s51 = ssub.s32 %s17, %s24
      %p52 = scmp.eq.s32.totalorder %s51, 0
      %s54 = sadd.s32 %s53, 1
      %s55 = scalar_select %p52, %s53, %s54
      %p58 = pneg %p52
      %p59 = scmp.eq.s32.totalorder %s17, 1
      %p60 = por %p58, %p59
      %p61 = scmp.ne.s32.totalorder %s53, %s56
      %p62 = scmp.eq.s32.totalorder %s17, 0
      %p63 = por %p61, %p62
      %p64 = scmp.ne.s32.totalorder %s53, %s56
      %p65 = scmp.eq.s32.totalorder %s22, 1
      %p66 = por %p64, %p65
      %p67 = scmp.ne.s32.totalorder %s56, %s57
      %p68 = scmp.eq.s32.totalorder %s22, 0
      %p69 = por %p67, %p68
      %p70 = scmp.ne.s32.totalorder %s56, %s57
      %p71 = scmp.eq.s32.totalorder %s23, 1
      %p72 = por %p70, %p71
      %p74 = scmp.ne.s32.totalorder %s57, %s73
      %p75 = scmp.eq.s32.totalorder %s23, 0
      %p76 = por %p74, %p75
      %s77 = ssub.s32 %s17, %s24
      %p78 = scmp.eq.s32.totalorder %s77, 0
      %s80 = sadd.s32 %s79, 1
      %s81 = scalar_select %p78, %s79, %s80
      %p84 = pneg %p78
      %p85 = scmp.eq.s32.totalorder %s17, 1
      %p86 = por %p84, %p85
      %p87 = scmp.ne.s32.totalorder %s79, %s82
      %p88 = scmp.eq.s32.totalorder %s17, 0
      %p89 = por %p87, %p88
      %p90 = scmp.ne.s32.totalorder %s79, %s82
      %p91 = scmp.eq.s32.totalorder %s22, 1
      %p92 = por %p90, %p91
      %p93 = scmp.ne.s32.totalorder %s82, %s83
      %p94 = scmp.eq.s32.totalorder %s22, 0
      %p95 = por %p93, %p94
      %p96 = scmp.ne.s32.totalorder %s82, %s83
      %p97 = scmp.eq.s32.totalorder %s23, 1
      %p98 = por %p96, %p97
      %p100 = scmp.ne.s32.totalorder %s83, %s99
      %p101 = scmp.eq.s32.totalorder %s23, 0
      %p102 = por %p100, %p101
      %p103 = scmp.le.s32.totalorder 1, %s17
      %p104 = scmp.lt.s32.totalorder %s17, 3
      %p105 = pnand %p103, %p104
      %p106 = pneg %p105
      // Predicated region
      $region9: #{tpu_custom_call.1} parent=5 // pred_check
        _
      $region10: #{tpu_custom_call.1} parent=5 // pred_check_branch
        %108 = sbr.rel (%p105) target = $region12
      $region11: #{tpu_custom_call.1} parent=5 // pred_region
        %s109 = ssub.s32 %s17, 1
      $region12: #{tpu_custom_call.1} parent=5 // pred_fallthru
        _
      %p110 = scmp.lt.s32.totalorder %s17, 2
      // Predicated region
      $region13: #{tpu_custom_call.1} parent=5 // pred_check
        %p111 = pneg %p110
      $region14: #{tpu_custom_call.1} parent=5 // pred_check_branch
        %113 = sbr.rel (%p111) target = $region16
      $region15: #{tpu_custom_call.1} parent=5 // pred_region
        // Predicated region
        $region17: #{tpu_custom_call.1} parent=15 // pred_check
          %p114 = pneg %p37
        $region18: #{tpu_custom_call.1} parent=15 // pred_check_branch
          %116 = sbr.rel (%p114) target = $region20
        $region19: #{tpu_custom_call.1} parent=15 // pred_region
          %s117 = sand.u32 %s27, 1
          %s118 = scalar_lea.sflag [#allocation3], %s117
          %s119 = sand.u32 %s27, 1
          %s120 = smul.addr %s119, 8
          %s121 = scalar_lea.vmem [#allocation2], %s120
          %123 = vsyncadd %s118, 0
          %s124 = smul.addr %s17, 8
          %s125 = scalar_lea.hbm %s0, %s124
          %s127 = sshll.u32 %s125, 4
          %s128 = int_to_ptr.hbm [resolvable:$true] %s127
          %s129 = sshll.u32 %s121, 4
          %s130 = int_to_ptr.vmem [resolvable:$true] %s129
          %132 = dma.hbm_to_vmem [thread:$0]  %s128, 128, %s130, %s118
        $region20: #{tpu_custom_call.1} parent=15 // pred_fallthru
          _
        // Predicated region
        $region21: #{tpu_custom_call.1} parent=15 // pred_check
          %p133 = pneg %p63
        $region22: #{tpu_custom_call.1} parent=15 // pred_check_branch
          %135 = sbr.rel (%p133) target = $region24
        $region23: #{tpu_custom_call.1} parent=15 // pred_region
          %s136 = sand.u32 %s53, 1
          %s137 = scalar_lea.sflag [#allocation6], %s136
          %s138 = sand.u32 %s53, 1
          %s139 = smul.addr %s138, 8
          %s140 = scalar_lea.vmem [#allocation5], %s139
          %142 = vsyncadd %s137, 0
          %s143 = smul.addr %s17, 8
          %s144 = scalar_lea.hbm %s1, %s143
          %s146 = sshll.u32 %s144, 4
          %s147 = int_to_ptr.hbm [resolvable:$true] %s146
          %s148 = sshll.u32 %s140, 4
          %s149 = int_to_ptr.vmem [resolvable:$true] %s148
          %151 = dma.hbm_to_vmem [thread:$0]  %s147, 128, %s149, %s137
        $region24: #{tpu_custom_call.1} parent=15 // pred_fallthru
          _
      $region16: #{tpu_custom_call.1} parent=5 // pred_fallthru
        _
      %p152 = scmp.le.s32.totalorder 1, %s17
      %p153 = scmp.lt.s32.totalorder %s17, 3
      %p154 = pnand %p152, %p153
      %p155 = pneg %p154
      // Predicated region
      $region25: #{tpu_custom_call.1} parent=5 // pred_check
        _
      $region26: #{tpu_custom_call.1} parent=5 // pred_check_branch
        %157 = sbr.rel (%p154) target = $region28
      $region27: #{tpu_custom_call.1} parent=5 // pred_region
        %s158 = ssub.s32 %s17, 1
        %s159 = sand.u32 %s30, 1
        %s160 = scalar_lea.sflag [#allocation3], %s159
        %s161 = sand.u32 %s30, 1
        %s162 = smul.addr %s161, 8
        %s163 = scalar_lea.vmem [#allocation2], %s162
        // Predicated region
        $region29: #{tpu_custom_call.1} parent=27 // pred_check
          %p164 = pneg %p43
        $region30: #{tpu_custom_call.1} parent=27 // pred_check_branch
          %166 = sbr.rel (%p164) target = $region32
        $region31: #{tpu_custom_call.1} parent=27 // pred_region
          %168 = dma.done %s160, 128
        $region32: #{tpu_custom_call.1} parent=27 // pred_fallthru
          _
        %s169 = sand.u32 %s56, 1
        %s170 = scalar_lea.sflag [#allocation6], %s169
        %s171 = sand.u32 %s56, 1
        %s172 = smul.addr %s171, 8
        %s173 = scalar_lea.vmem [#allocation5], %s172
        // Predicated region
        $region33: #{tpu_custom_call.1} parent=27 // pred_check
          %p174 = pneg %p69
        $region34: #{tpu_custom_call.1} parent=27 // pred_check_branch
          %176 = sbr.rel (%p174) target = $region36
        $region35: #{tpu_custom_call.1} parent=27 // pred_region
          %178 = dma.done %s170, 128
        $region36: #{tpu_custom_call.1} parent=27 // pred_fallthru
          _
        %s179 = sand.u32 %s30, 1
        %s180 = scalar_lea.sflag [#allocation3], %s179
        %s181 = sand.u32 %s30, 1
        %s182 = smul.addr %s181, 8
        %s183 = scalar_lea.vmem [#allocation2], %s182
        %p184 = pneg %p43
        %p185 = pneg %p40
        %s186 = sand.u32 %s56, 1
        %s187 = scalar_lea.sflag [#allocation6], %s186
        %s188 = sand.u32 %s56, 1
        %s189 = smul.addr %s188, 8
        %s190 = scalar_lea.vmem [#allocation5], %s189
        %p191 = pneg %p69
        %p192 = pneg %p66
        %p193 = pneg %p95
        %p194 = pneg %p92
        %s195 = sand.u32 %s82, 1
        %s196 = scalar_lea.sflag [#allocation4], %s195
        %s197 = sand.u32 %s82, 1
        %s198 = smul.addr %s197, 8
        %s199 = scalar_lea.vmem [#allocation7], %s198
        %v200 = vld [vmem:[%s163] sm:$0xff]
        %v201 = vld [vmem:[%s173] sm:$0xff]
        %v202 = vadd.f32 %v200, %v201
        %203 = vst [vmem:[%s199] sm:$0xff] %v202
        %s204 = sand.u32 %s82, 1
        %s205 = scalar_lea.sflag [#allocation4], %s204
        %s206 = sand.u32 %s82, 1
        %s207 = smul.addr %s206, 8
        %s208 = scalar_lea.vmem [#allocation7], %s207
        // Predicated region
        $region37: #{tpu_custom_call.1} parent=27 // pred_check
          %p209 = pneg %p92
        $region38: #{tpu_custom_call.1} parent=27 // pred_check_branch
          %211 = sbr.rel (%p209) target = $region40
        $region39: #{tpu_custom_call.1} parent=27 // pred_region
          %213 = vsyncadd %s205, 0
          %s214 = smul.addr %s22, 8
          %s215 = scalar_lea.hbm %s2, %s214
          %s217 = sshll.u32 %s208, 4
          %s218 = int_to_ptr.vmem [resolvable:$true] %s217
          %s219 = sshll.u32 %s215, 4
          %s220 = int_to_ptr.hbm [resolvable:$true] %s219
          %222 = dma.vmem_to_hbm [thread:$0]  %s218, 128, %s220, %s205
        $region40: #{tpu_custom_call.1} parent=27 // pred_fallthru
          _
      $region28: #{tpu_custom_call.1} parent=5 // pred_fallthru
        _
      %p223 = scmp.le.s32.totalorder 2, %s17
      // Predicated region
      $region41: #{tpu_custom_call.1} parent=5 // pred_check
        %p224 = pneg %p223
      $region42: #{tpu_custom_call.1} parent=5 // pred_check_branch
        %226 = sbr.rel (%p224) target = $region44
      $region43: #{tpu_custom_call.1} parent=5 // pred_region
        %s227 = ssub.s32 %s17, 2
        // Predicated region
        $region45: #{tpu_custom_call.1} parent=43 // pred_check
          %p228 = pneg %p98
        $region46: #{tpu_custom_call.1} parent=43 // pred_check_branch
          %230 = sbr.rel (%p228) target = $region48
        $region47: #{tpu_custom_call.1} parent=43 // pred_region
          %s231 = sand.u32 %s83, 1
          %s232 = scalar_lea.sflag [#allocation4], %s231
          %s233 = sand.u32 %s83, 1
          %s234 = smul.addr %s233, 8
          %s235 = scalar_lea.vmem [#allocation7], %s234
          %237 = dma.done %s232, 128
        $region48: #{tpu_custom_call.1} parent=43 // pred_fallthru
          _
      $region44: #{tpu_custom_call.1} parent=5 // pred_fallthru
        _
    $region6: #{tpu_custom_call.1} parent=1 // loop_footer
      %s21 = sadd.s32 1, %s17
    $region7: #{tpu_custom_call.1} parent=1 // loop_footer_branch
      %16 = sbr.rel target = $region3
    $region8: #{tpu_custom_call.1} parent=1 // loop_exit
      _
    %238 = vsyncpa [#allocation3], 1
    %s239 = scalar_lea.sflag [#allocation3], 1
    %240 = vsyncpa %s239, 1
    %241 = vsyncpa [#allocation6], 1
    %s242 = scalar_lea.sflag [#allocation6], 1
    %243 = vsyncpa %s242, 1
    %244 = vsyncpa [#allocation4], 1
    %s245 = scalar_lea.sflag [#allocation4], 1
    %246 = vsyncpa %s245, 1

</llo_original>
